<compile_context>
chip_gen: v5e
topology: v5e:2x2
jax: 0.10.0
libtpu: 0.0.40
codegen_flags: <defaults>
</compile_context>

<pallas_src>
import jax
import jax.numpy as jnp
from jax.experimental import pallas as pl
from jax.experimental.pallas import tpu as pltpu


def _round_up(n, m):
    return ((n + m - 1) // m) * m


# ---------------------------------------------------------------------------
# Kernels
# ---------------------------------------------------------------------------

def _net_kernel(x_ref, w1_ref, b1_ref, w2_ref, b2_ref, q_ref):
    # Layer 1: (TB, F) @ (F, H_p) -> f32 accumulate on the MXU
    h = jnp.dot(x_ref[...], w1_ref[...], preferred_element_type=jnp.float32)
    # Bias + ReLU in f32 on the VPU (v5e has no bf16 VPU)
    h = jnp.maximum(h + b1_ref[...], 0.0)
    # Layer 2: (TB, H_p) @ (H_p, O) -> f32 accumulate
    q = jnp.dot(h.astype(w2_ref.dtype), w2_ref[...],
                preferred_element_type=jnp.float32)
    q_ref[...] = (q + b2_ref[...]).astype(q_ref.dtype)


def _net_act_kernel(x_ref, w1_ref, b1_ref, w2_ref, b2_ref, act_ref, qmax_ref):
    # Same forward pass, but fuse the DQN action selection: write only the
    # argmax action and max-Q per row instead of the full Q slab.
    h = jnp.dot(x_ref[...], w1_ref[...], preferred_element_type=jnp.float32)
    h = jnp.maximum(h + b1_ref[...], 0.0)
    q = jnp.dot(h.astype(w2_ref.dtype), w2_ref[...],
                preferred_element_type=jnp.float32)
    q = q + b2_ref[...]
    n_out = q.shape[-1]
    qmax = jnp.max(q, axis=-1, keepdims=True)
    ids = jax.lax.broadcasted_iota(jnp.int32, q.shape, 1)
    # First index attaining the max (matches torch/np argmax tie-breaking)
    act = jnp.min(jnp.where(q == qmax, ids, n_out), axis=-1, keepdims=True)
    act_ref[...] = act.astype(jnp.int32)
    qmax_ref[...] = qmax.astype(qmax_ref.dtype)


# ---------------------------------------------------------------------------
# Parameter preparation (run ONCE at init, not in the hot path)
# ---------------------------------------------------------------------------

def prepare_params(w1, b1, w2, b2, *, matmul_dtype=jnp.bfloat16):
    """Pad/cast parameters once.

    w1: (n_feature, n_hidden)  (already transposed vs. PyTorch's (out, in))
    b1: (1, n_hidden) or (n_hidden,)
    w2: (n_hidden, n_output)
    b2: (1, n_output) or (n_output,)

    Only the hidden dim is padded (to a lane multiple of 128); feature and
    output dims stay at their natural size (full-dim blocks). Weights are cast
    to `matmul_dtype` (bf16 default: valid on v5e/v6e/v7x MXUs, halves HBM/VMEM
    operand bytes); biases stay f32 for the f32 VPU epilogue.
    """
    f32 = jnp.float32
    F, H = w1.shape
    O = w2.shape[1]
    H_p = _round_up(H, 128)

    w1_p = jnp.zeros((F, H_p), f32).at[:, :H].set(w1.astype(f32)).astype(matmul_dtype)
    b1_p = jnp.zeros((1, H_p), f32).at[:, :H].set(jnp.reshape(b1, (1, H)).astype(f32))
    w2_p = jnp.zeros((H_p, O), f32).at[:H, :].set(w2.astype(f32)).astype(matmul_dtype)
    b2_p = jnp.reshape(b2, (1, O)).astype(f32)

    return {"w1": w1_p, "b1": b1_p, "w2": w2_p, "b2": b2_p,
            "n_feature": F, "n_hidden": H, "n_output": O}


def _prep_call(x, params, block_b):
    """Shared per-call setup: batch tiling, (cheap) batch pad, in_specs."""
    w1, b1, w2, b2 = params["w1"], params["b1"], params["w2"], params["b2"]
    B, F = x.shape
    assert F == w1.shape[0], "feature dim mismatch"
    H_p = w1.shape[1]
    O = w2.shape[1]

    # Batch tile: multiple of 8 sublanes (default 512 is also a multiple of 16
    # for bf16 packing); for B <= block_b the grid collapses to one step.
    TB = min(_round_up(block_b, 8), _round_up(B, 8))
    B_p = _round_up(B, TB)

    # Cast BEFORE padding so the (rare) pad copy is on the narrow dtype.
    x = x.astype(w1.dtype)
    if B_p != B:
        x = jnp.pad(x, ((0, B_p - B), (0, 0)))

    in_specs = [
        # x: tiled over the batch grid axis, feature dim un-padded (full dim)
        pl.BlockSpec((TB, F), lambda i: (i, 0)),
        # weights / biases: constant index_map -> fetched once, resident in VMEM
        pl.BlockSpec((F, H_p), lambda i: (0, 0)),
        pl.BlockSpec((1, H_p), lambda i: (0, 0)),
        pl.BlockSpec((H_p, O), lambda i: (0, 0)),
        pl.BlockSpec((1, O), lambda i: (0, 0)),
    ]
    return x, (w1, b1, w2, b2), in_specs, (B, B_p, TB, F, H_p, O)


def _cost(B_p, F, H_p, O, w_itemsize, x_itemsize, out_bytes):
    flops = 2 * B_p * (F * H_p + H_p * O)
    bytes_accessed = (B_p * F * x_itemsize
                      + F * H_p * w_itemsize + H_p * O * w_itemsize
                      + (H_p + O) * 4
                      + out_bytes)
    return pl.CostEstimate(flops=flops, transcendentals=0,
                           bytes_accessed=bytes_accessed)


# ---------------------------------------------------------------------------
# Public entry points
# ---------------------------------------------------------------------------

def net_forward(x, params, *, block_b=512):
    """Net.forward: relu(x @ w1 + b1) @ w2 + b2 -> (B, n_output) f32 Q-values."""
    x_p, args, in_specs, (B, B_p, TB, F, H_p, O) = _prep_call(x, params, block_b)
    itemsize = jnp.dtype(args[0].dtype).itemsize

    out = pl.pallas_call(
        _net_kernel,
        out_shape=jax.ShapeDtypeStruct((B_p, O), jnp.float32),
        grid_spec=pl.GridSpec(
            grid=(B_p // TB,),
            in_specs=in_specs,
            out_specs=pl.BlockSpec((TB, O), lambda i: (i, 0)),
        ),
        compiler_params=pltpu.CompilerParams(
            # Batch tiles are independent -> shard across TCs on v7x megacore
            # (only helps when the grid has >1 step, i.e. large batches).
            dimension_semantics=("parallel",),
        ),
        cost_estimate=_cost(B_p, F, H_p, O, itemsize, itemsize, B_p * O * 4),
    )(x_p, *args)

    return out[:B] if B_p != B else out


def net_select_action(x, params, *, block_b=512):
    """Fused DQN act() path: returns (action int32 (B,), max_q f32 (B,))."""
    # TODO(synk): for single-state act() on v7x, batch multiple env states per
    # call (caller side) so the second TensorCore is not idle.
    x_p, args, in_specs, (B, B_p, TB, F, H_p, O) = _prep_call(x, params, block_b)
    itemsize = jnp.dtype(args[0].dtype).itemsize

    act, qmax = pl.pallas_call(
        _net_act_kernel,
        out_shape=(jax.ShapeDtypeStruct((B_p, 1), jnp.int32),
                   jax.ShapeDtypeStruct((B_p, 1), jnp.float32)),
        grid_spec=pl.GridSpec(
            grid=(B_p // TB,),
            in_specs=in_specs,
            out_specs=(pl.BlockSpec((TB, 1), lambda i: (i, 0)),
                       pl.BlockSpec((TB, 1), lambda i: (i, 0))),
        ),
        compiler_params=pltpu.CompilerParams(
            dimension_semantics=("parallel",),
        ),
        cost_estimate=_cost(B_p, F, H_p, O, itemsize, itemsize, B_p * 8),
    )(x_p, *args)

    return act[:B, 0], qmax[:B, 0]


def init_params(key, n_feature, n_hidden, n_output):
    """Deterministic synthetic init (uniform, PyTorch-Linear-like bounds)."""
    k1, k2, k3, k4 = jax.random.split(key, 4)
    bound1 = 1.0 / jnp.sqrt(n_feature)
    bound2 = 1.0 / jnp.sqrt(n_hidden)
    # Stored as (in_dim, out_dim), i.e. already transposed vs. PyTorch (out,in)
    w1 = jax.random.uniform(k1, (n_feature, n_hidden), jnp.float32, -bound1, bound1)
    b1 = jax.random.uniform(k2, (1, n_hidden), jnp.float32, -bound1, bound1)
    w2 = jax.random.uniform(k3, (n_hidden, n_output), jnp.float32, -bound2, bound2)
    b2 = jax.random.uniform(k4, (1, n_output), jnp.float32, -bound2, bound2)
    return w1, b1, w2, b2


if __name__ == "__main__":
    # Small shapes consistent with the module: batch=8, n_feature=16,
    # n_hidden=32, n_output=4 (state-dim 16 -> 4 Q-values).
    B, n_feature, n_hidden, n_output = 8, 16, 32, 4

    key = jax.random.PRNGKey(0)
    kx, kp = jax.random.split(key)
    x = jax.random.normal(kx, (B, n_feature), jnp.float32)
    w1, b1, w2, b2 = init_params(kp, n_feature, n_hidden, n_output)

    # Pure-JAX reference of the same semantics
    ref = jnp.maximum(x @ w1 + b1, 0.0) @ w2 + b2

    # --- f32 MXU operands: exact path, tight tolerance ----------------------
    params_f32 = prepare_params(w1, b1, w2, b2, matmul_dtype=jnp.float32)
    q_f32 = jax.block_until_ready(net_forward(x, params_f32))
    assert q_f32.shape == (B, n_output)
    assert jnp.allclose(q_f32, ref, atol=1e-5, rtol=1e-5)

    # --- bf16 MXU operands (default): looser tolerance (documented) ---------
    params_bf16 = prepare_params(w1, b1, w2, b2)  # matmul_dtype=bfloat16
    q_bf16 = jax.block_until_ready(net_forward(x, params_bf16))
    assert q_bf16.shape == (B, n_output)
    assert jnp.allclose(q_bf16, ref, atol=3e-2, rtol=3e-2)

    # --- fused argmax (DQN act() path) --------------------------------------
    act, qmax = net_select_action(x, params_f32)
    act = jax.block_until_ready(act)
    qmax = jax.block_until_ready(qmax)
    assert act.shape == (B,) and qmax.shape == (B,)
    assert jnp.array_equal(act, jnp.argmax(q_f32, axis=-1).astype(jnp.int32))
    assert jnp.allclose(qmax, jnp.max(q_f32, axis=-1), atol=1e-5, rtol=1e-5)

    print("KERNEL_OK")
</pallas_src>

<mosaic_0001>
module attributes {stable_mosaic.version = 11 : i64} {
  func.func @_net_kernel(%arg0: i32, %arg1: memref<8x16xf32, #tpu.memory_space<vmem>>, %arg2: memref<16x128xf32, #tpu.memory_space<vmem>>, %arg3: memref<1x128xf32, #tpu.memory_space<vmem>>, %arg4: memref<128x4xf32, #tpu.memory_space<vmem>>, %arg5: memref<1x4xf32, #tpu.memory_space<vmem>>, %arg6: memref<8x4xf32, #tpu.memory_space<vmem>>) attributes {dimension_semantics = [#tpu.dimension_semantics<parallel>], iteration_bounds = array<i64: 1>, scalar_prefetch = 0 : i64, scratch_operands = 0 : i64, tpu.core_type = #tpu.core_type<tc>, window_params = [{transform_indices = @transform_0, window_bounds = array<i64: 8, 16>}, {pipeline_mode = #tpu.pipeline_mode<synchronous>, transform_indices = @transform_1, window_bounds = array<i64: 16, 128>}, {pipeline_mode = #tpu.pipeline_mode<synchronous>, transform_indices = @transform_2, window_bounds = array<i64: 1, 128>}, {pipeline_mode = #tpu.pipeline_mode<synchronous>, transform_indices = @transform_3, window_bounds = array<i64: 128, 4>}, {pipeline_mode = #tpu.pipeline_mode<synchronous>, transform_indices = @transform_4, window_bounds = array<i64: 1, 4>}, {transform_indices = @transform_5, window_bounds = array<i64: 8, 4>}]} {
    %c0 = arith.constant 0 : index
    %c0_0 = arith.constant 0 : index
    %0 = vector.load %arg1[%c0, %c0_0] : memref<8x16xf32, #tpu.memory_space<vmem>>, vector<8x16xf32>
    %c0_1 = arith.constant 0 : index
    %c0_2 = arith.constant 0 : index
    %1 = vector.load %arg2[%c0_1, %c0_2] : memref<16x128xf32, #tpu.memory_space<vmem>>, vector<16x128xf32>
    %cst = arith.constant dense<0.000000e+00> : vector<8x128xf32>
    %2 = tpu.matmul %0, %1, %cst {dimension_numbers = #tpu.dot_dimension_numbers<[1], [0], [0], [1], [0, 0, 1, 1], [], []>} : vector<8x16xf32>, vector<16x128xf32>, vector<8x128xf32> -> vector<8x128xf32>
    %c0_3 = arith.constant 0 : index
    %c0_4 = arith.constant 0 : index
    %3 = vector.load %arg3[%c0_3, %c0_4] : memref<1x128xf32, #tpu.memory_space<vmem>>, vector<1x128xf32>
    %4 = vector.broadcast %3 : vector<1x128xf32> to vector<8x128xf32>
    %5 = arith.addf %2, %4 : vector<8x128xf32>
    %cst_5 = arith.constant 0.000000e+00 : f32
    %6 = vector.broadcast %cst_5 : f32 to vector<8x128xf32>
    %7 = arith.maximumf %5, %6 : vector<8x128xf32>
    %c0_6 = arith.constant 0 : index
    %c0_7 = arith.constant 0 : index
    %8 = vector.load %arg4[%c0_6, %c0_7] : memref<128x4xf32, #tpu.memory_space<vmem>>, vector<128x4xf32>
    %cst_8 = arith.constant dense<0.000000e+00> : vector<8x4xf32>
    %9 = tpu.matmul %7, %8, %cst_8 {dimension_numbers = #tpu.dot_dimension_numbers<[1], [0], [0], [1], [0, 0, 1, 1], [], []>} : vector<8x128xf32>, vector<128x4xf32>, vector<8x4xf32> -> vector<8x4xf32>
    %c0_9 = arith.constant 0 : index
    %c0_10 = arith.constant 0 : index
    %10 = vector.load %arg5[%c0_9, %c0_10] : memref<1x4xf32, #tpu.memory_space<vmem>>, vector<1x4xf32>
    %11 = vector.broadcast %10 : vector<1x4xf32> to vector<8x4xf32>
    %12 = arith.addf %9, %11 : vector<8x4xf32>
    %c0_11 = arith.constant 0 : index
    %c0_12 = arith.constant 0 : index
    %13 = vector.load %arg6[%c0_11, %c0_12] : memref<8x4xf32, #tpu.memory_space<vmem>>, vector<8x4xf32>
    tpu.vector_store %arg6[%c0_11, %c0_12], %12 {strides = array<i32>} : memref<8x4xf32, #tpu.memory_space<vmem>>, vector<8x4xf32>,
    return
  }
  func.func @transform_0(%arg0: i32) -> (i32, i32) {
    %c0_i32 = arith.constant 0 : i32
    %c0_i32_0 = arith.constant 0 : i32
    return %arg0, %c0_i32 : i32, i32
  }
  func.func @transform_1(%arg0: i32) -> (i32, i32) {
    %c0_i32 = arith.constant 0 : i32
    %c0_i32_0 = arith.constant 0 : i32
    %c0_i32_1 = arith.constant 0 : i32
    return %c0_i32, %c0_i32_0 : i32, i32
  }
  func.func @transform_2(%arg0: i32) -> (i32, i32) {
    %c0_i32 = arith.constant 0 : i32
    %c0_i32_0 = arith.constant 0 : i32
    %c0_i32_1 = arith.constant 0 : i32
    return %c0_i32, %c0_i32_0 : i32, i32
  }
  func.func @transform_3(%arg0: i32) -> (i32, i32) {
    %c0_i32 = arith.constant 0 : i32
    %c0_i32_0 = arith.constant 0 : i32
    %c0_i32_1 = arith.constant 0 : i32
    return %c0_i32, %c0_i32_0 : i32, i32
  }
  func.func @transform_4(%arg0: i32) -> (i32, i32) {
    %c0_i32 = arith.constant 0 : i32
    %c0_i32_0 = arith.constant 0 : i32
    %c0_i32_1 = arith.constant 0 : i32
    return %c0_i32, %c0_i32_0 : i32, i32
  }
  func.func @transform_5(%arg0: i32) -> (i32, i32) {
    %c0_i32 = arith.constant 0 : i32
    %c0_i32_0 = arith.constant 0 : i32
    return %arg0, %c0_i32 : i32, i32
  }
}

</mosaic_0001>

<llo_original>
// kernel: tpu_custom_call.1
$region0: #{tpu_custom_call.1}
  #allocation0 [shape = 'u32[]', space=smem, size = 0x4, offset = 0x4, fixed_abs, tag = 'smem constant byte address 0x4 - core index']
  #allocation1 [shape = 'u32[72,128]{1,0:T(1,128)}', space=vmem, size = 0x9000, scoped, tag = 'internal scratch']
  %s0 = inlined_call_operand.vmem [shape: f32[8,16], index: 0, kind: input, shape index: {}]
  %s1 = inlined_call_operand.vmem [shape: f32[16,128], index: 1, kind: input, shape index: {}]
  %s2 = inlined_call_operand.vmem [shape: f32[1,128], index: 2, kind: input, shape index: {}]
  %s3 = inlined_call_operand.vmem [shape: f32[128,4], index: 3, kind: input, shape index: {}]
  %s4 = inlined_call_operand.vmem [shape: f32[1,4], index: 4, kind: input, shape index: {}]
  %s5 = inlined_call_operand.vmem [shape: f32[8,4], index: 5, kind: output, shape index: {}]
  %s6 = sld [smem:[#allocation0]]
  $region30: #{tpu_custom_call.1} parent=0
    _
  %s8 = ssub.s32 1, %s6
  %s9 = scalar_select 0, %s8, %s6
  // Predicated region
  $region2: #{tpu_custom_call.1} parent=0 // pred_check
    _
  $region3: #{tpu_custom_call.1} parent=0 // pred_check_branch
    %11 = sbr.rel (0) target = $region5
  $region4: #{tpu_custom_call.1} parent=0 // pred_region
    _
  $region5: #{tpu_custom_call.1} parent=0 // pred_fallthru
    _
  // Predicated region
  $region6: #{tpu_custom_call.1} parent=0 // pred_check
    _
  $region7: #{tpu_custom_call.1} parent=0 // pred_check_branch
    %13 = sbr.rel (0) target = $region9
  $region8: #{tpu_custom_call.1} parent=0 // pred_region
    _
  $region9: #{tpu_custom_call.1} parent=0 // pred_fallthru
    _
  // Predicated region
  $region10: #{tpu_custom_call.1} parent=0 // pred_check
    _
  $region11: #{tpu_custom_call.1} parent=0 // pred_check_branch
    %15 = sbr.rel (0) target = $region13
  $region12: #{tpu_custom_call.1} parent=0 // pred_region
    _
  $region13: #{tpu_custom_call.1} parent=0 // pred_fallthru
    _
  // Predicated region
  $region14: #{tpu_custom_call.1} parent=0 // pred_check
    _
  $region15: #{tpu_custom_call.1} parent=0 // pred_check_branch
    %17 = sbr.rel (0) target = $region17
  $region16: #{tpu_custom_call.1} parent=0 // pred_region
    _
  $region17: #{tpu_custom_call.1} parent=0 // pred_fallthru
    _
  // Predicated region
  $region18: #{tpu_custom_call.1} parent=0 // pred_check
    _
  $region19: #{tpu_custom_call.1} parent=0 // pred_check_branch
    %19 = sbr.rel (0) target = $region21
  $region20: #{tpu_custom_call.1} parent=0 // pred_region
    _
  $region21: #{tpu_custom_call.1} parent=0 // pred_fallthru
    _
  %v20 = vld [vmem:[%s0] sm:$0xff]
  %v21 = vld [vmem:[%s1] sm:$0xff]
  %v22 = vld [vmem:[%s1 + $0x8] sm:$0xff]
  %v23 = vld [vmem:[%s2] sm:$0x1]
  %v25 = vperm.slane %v23, 0
  %vm27 = vcmask 130048
  %v29 = vsel %vm27, %v20, 0
  %31 = vmatpush.msra.mxu0 0.0
  %32 = vmatpush.msra.mxu0 0.0
  %33 = vmatpush.msra.mxu0 0.0
  %34 = vmatpush.msra.mxu0 0.0
  %35 = vmatpush.msra.mxu0 0.0
  %36 = vmatpush.msra.mxu0 0.0
  %37 = vmatpush.msra.mxu0 0.0
  %38 = vmatpush.msra.mxu0 0.0
  %39 = vmatpush.msra.mxu0 0.0
  %40 = vmatpush.msra.mxu0 0.0
  %41 = vmatpush.msra.mxu0 0.0
  %42 = vmatpush.msra.mxu0 0.0
  %43 = vmatpush.msra.mxu0 0.0
  %44 = vmatpush.msra.mxu0 0.0
  %45 = vmatpush.msra.mxu0 %v22
  %46 = vmatpush.msra.mxu0 %v21
  %47 = vmatmul.f32.gmra.mxu0 %v29
  %v48 = vpop.f32.mrf.mxu0
  %v49 = vadd.f32 %v25, %v48
  %50 = vdwg.mxu0
  %v51 = vmax.f32 %v49, 0.0
  %v52 = vld [vmem:[%s3] sm:$0xff]
  %v53 = vld [vmem:[%s3 + $0x8] sm:$0xff]
  %v54 = vld [vmem:[%s3 + $0x10] sm:$0xff]
  %v55 = vld [vmem:[%s3 + $0x18] sm:$0xff]
  %v56 = vld [vmem:[%s3 + $0x20] sm:$0xff]
  %v57 = vld [vmem:[%s3 + $0x28] sm:$0xff]
  %v58 = vld [vmem:[%s3 + $0x30] sm:$0xff]
  %v59 = vld [vmem:[%s3 + $0x38] sm:$0xff]
  %v60 = vld [vmem:[%s3 + $0x40] sm:$0xff]
  %v61 = vld [vmem:[%s3 + $0x48] sm:$0xff]
  %v62 = vld [vmem:[%s3 + $0x50] sm:$0xff]
  %v63 = vld [vmem:[%s3 + $0x58] sm:$0xff]
  %v64 = vld [vmem:[%s3 + $0x60] sm:$0xff]
  %v65 = vld [vmem:[%s3 + $0x68] sm:$0xff]
  %v66 = vld [vmem:[%s3 + $0x70] sm:$0xff]
  %v67 = vld [vmem:[%s3 + $0x78] sm:$0xff]
  %v68 = vld [vmem:[%s4] sm:$0x1]
  %v70 = vperm.slane %v68, 0
  %72 = vmatpush.msra.mxu0 %v67
  %73 = vmatpush.msra.mxu0 %v66
  %74 = vmatpush.msra.mxu0 %v65
  %75 = vmatpush.msra.mxu0 %v64
  %76 = vmatpush.msra.mxu0 %v63
  %77 = vmatpush.msra.mxu0 %v62
  %78 = vmatpush.msra.mxu0 %v61
  %79 = vmatpush.msra.mxu0 %v60
  %80 = vmatpush.msra.mxu0 %v59
  %81 = vmatpush.msra.mxu0 %v58
  %82 = vmatpush.msra.mxu0 %v57
  %83 = vmatpush.msra.mxu0 %v56
  %84 = vmatpush.msra.mxu0 %v55
  %85 = vmatpush.msra.mxu0 %v54
  %86 = vmatpush.msra.mxu0 %v53
  %87 = vmatpush.msra.mxu0 %v52
  %88 = vmatmul.f32.gmra.mxu0 %v51
  %v89 = vpop.f32.mrf.mxu0
  %v90 = vadd.f32 %v70, %v89
  %91 = vdwg.mxu0
  %vm92 = vcmask 31744
  %93 = vst.msk [vmem:[%s5] sm:$0xff] %vm92, %v90
  // Predicated region
  $region22: #{tpu_custom_call.1} parent=0 // pred_check
    _
  $region23: #{tpu_custom_call.1} parent=0 // pred_check_branch
    %95 = sbr.rel (0) target = $region25
  $region24: #{tpu_custom_call.1} parent=0 // pred_region
    _
  $region25: #{tpu_custom_call.1} parent=0 // pred_fallthru
    _
  // Predicated region
  $region26: #{tpu_custom_call.1} parent=0 // pred_check
    _
  $region27: #{tpu_custom_call.1} parent=0 // pred_check_branch
    %97 = sbr.rel (0) target = $region29
  $region28: #{tpu_custom_call.1} parent=0 // pred_region
    _
  $region29: #{tpu_custom_call.1} parent=0 // pred_fallthru
    _

</llo_original>
